<compile_context>
chip_gen: v7x
topology: tpu7x:2x2x1
jax: 0.10.0
libtpu: 0.0.40
codegen_flags: <defaults>
</compile_context>

<pallas_src>
import jax
import jax.numpy as jnp
from jax.experimental import pallas as pl
from jax.experimental.pallas import tpu as pltpu

BN_EPS = 1e-5
DEFAULT_B_TILE = 4096  # rows per grid step; sized for v7x's 32 MiB scoped VMEM


def _round_up(n, m):
    return ((n + m - 1) // m) * m


# --------------------------------------------------------------------------- #
# Kernel: one batch tile through the whole (BN-folded) MLP.
# --------------------------------------------------------------------------- #
def _mlp_kernel(x_ref, w1_ref, b1_ref, w2_ref, b2_ref, w3_ref, b3_ref,
                w4_ref, b4_ref, out_ref):
    # Layer 1 (BN folded): bf16 x bf16 -> f32 accumulate on the MXU.
    h = jnp.dot(x_ref[...], w1_ref[...], preferred_element_type=jnp.float32)
    h = jnp.maximum(h + b1_ref[...], 0.0)

    # Layer 2 (BN folded).
    h = jnp.dot(h.astype(jnp.bfloat16), w2_ref[...],
                preferred_element_type=jnp.float32)
    h = jnp.maximum(h + b2_ref[...], 0.0)

    # Layer 3, zero-padded to 128 output columns so the tail stays lane-dense.
    h = jnp.dot(h.astype(jnp.bfloat16), w3_ref[...],
                preferred_element_type=jnp.float32)
    h = jnp.maximum(h + b3_ref[...], 0.0)

    # Layer 4 (32 -> 1, zero-padded to 128): VPU broadcast-multiply + lane
    # reduction instead of an N=1 MXU matmul.
    out = jnp.sum(h * w4_ref[...], axis=-1, keepdims=True) + b4_ref[...]
    out_ref[...] = out.astype(out_ref.dtype)


# --------------------------------------------------------------------------- #
# Host-side parameter preparation: fold BN, pad tail to 128 lanes, cast bf16.
# --------------------------------------------------------------------------- #
def _fold_params(params):
    s1 = params["g1"] * jax.lax.rsqrt(params["rv1"] + BN_EPS)
    w1 = params["w1"] * s1
    b1 = (params["b1"] - params["rm1"]) * s1 + params["beta1"]

    s2 = params["g2"] * jax.lax.rsqrt(params["rv2"] + BN_EPS)
    w2 = params["w2"] * s2
    b2 = (params["b2"] - params["rm2"]) * s2 + params["beta2"]

    # Zero-pad the 32-wide tail to 128 columns (free: relu(0) = 0 and the
    # padded w4 entries are 0, so the extra lanes contribute nothing).
    pad = 128 - 32
    w3 = jnp.pad(params["w3"], ((0, 0), (0, pad)))      # (128, 128)
    b3 = jnp.pad(params["b3"], ((0, 0), (0, pad)))      # (1, 128)
    w4 = jnp.pad(params["w4"].T, ((0, 0), (0, pad)))    # (1, 128) row vector
    b4 = params["b4"]                                   # (1, 1)

    return dict(
        w1=w1.astype(jnp.bfloat16), b1=b1.astype(jnp.float32),
        w2=w2.astype(jnp.bfloat16), b2=b2.astype(jnp.float32),
        w3=w3.astype(jnp.bfloat16), b3=b3.astype(jnp.float32),
        w4=w4.astype(jnp.float32),  b4=b4.astype(jnp.float32),
    )


# --------------------------------------------------------------------------- #
# Wrapper
# --------------------------------------------------------------------------- #
def eeg_baseline_mlp_forward(x, params, *, b_tile=DEFAULT_B_TILE):
    """Run the MLP; returns (logits, 1) to mirror the PyTorch forward."""
    B, D = x.shape
    fp = _fold_params(params)

    # bf16 sublane packing -> keep tiles a multiple of 16 rows.
    b_tile = min(b_tile, _round_up(B, 16))
    b_pad = _round_up(B, b_tile)

    xb = x.astype(jnp.bfloat16)
    if b_pad != B:
        xb = jnp.pad(xb, ((0, b_pad - B), (0, 0)))

    grid = (b_pad // b_tile,)

    def const2d(shape):
        # Weight / bias block: full array, same block every grid step
        # (fetched once, stays VMEM-resident).
        return pl.BlockSpec(shape, lambda i: (0, 0))

    flops = 2 * b_pad * (D * 256 + 256 * 128 + 128 * 128 + 128)
    bytes_accessed = (
        b_pad * D * 2                       # x (bf16)
        + b_pad * 4                         # logits (f32)
        + (D * 256 + 256 * 128 + 128 * 128) * 2   # bf16 weights
        + (256 + 128 + 128 + 128 + 1) * 4         # f32 biases / w4 row
    )

    logits = pl.pallas_call(
        _mlp_kernel,
        out_shape=jax.ShapeDtypeStruct((b_pad, 1), jnp.float32),
        grid=grid,
        in_specs=[
            pl.BlockSpec((b_tile, D), lambda i: (i, 0)),   # x: streamed
            const2d((D, 256)), const2d((1, 256)),          # w1, b1
            const2d((256, 128)), const2d((1, 128)),        # w2, b2
            const2d((128, 128)), const2d((1, 128)),        # w3, b3 (padded)
            const2d((1, 128)), const2d((1, 1)),            # w4 row, b4
        ],
        out_specs=pl.BlockSpec((b_tile, 1), lambda i: (i, 0)),
        compiler_params=pltpu.CompilerParams(
            dimension_semantics=("parallel",),
            vmem_limit_bytes=32 * 1024 * 1024,
        ),
        cost_estimate=pl.CostEstimate(
            flops=flops, transcendentals=0, bytes_accessed=bytes_accessed),
    )(xb, fp["w1"], fp["b1"], fp["w2"], fp["b2"], fp["w3"], fp["b3"],
      fp["w4"], fp["b4"])

    return logits[:B], 1


# --------------------------------------------------------------------------- #
# Parameter init (matches nn.Linear / nn.BatchNorm1d shapes & defaults)
# --------------------------------------------------------------------------- #
def init_params(input_dim, key):
    dims = [(input_dim, 256), (256, 128), (128, 32), (32, 1)]
    keys = jax.random.split(key, 2 * len(dims))
    params = {}
    for i, (din, dout) in enumerate(dims):
        bound = 1.0 / jnp.sqrt(float(din))
        # weights stored pre-transposed: (in, out)
        params[f"w{i+1}"] = jax.random.uniform(
            keys[2 * i], (din, dout), jnp.float32, -bound, bound)
        params[f"b{i+1}"] = jax.random.uniform(
            keys[2 * i + 1], (1, dout), jnp.float32, -bound, bound)
    for i, feat in [(1, 256), (2, 128)]:
        params[f"g{i}"] = jnp.ones((1, feat), jnp.float32)
        params[f"beta{i}"] = jnp.zeros((1, feat), jnp.float32)
        params[f"rm{i}"] = jnp.zeros((1, feat), jnp.float32)
        params[f"rv{i}"] = jnp.ones((1, feat), jnp.float32)
    return params


# --------------------------------------------------------------------------- #
# References
# --------------------------------------------------------------------------- #
def _reference_f32(x, p):
    """Full-precision eval-mode reference (un-folded BN)."""
    h = x @ p["w1"] + p["b1"]
    h = (h - p["rm1"]) * jax.lax.rsqrt(p["rv1"] + BN_EPS) * p["g1"] + p["beta1"]
    h = jnp.maximum(h, 0.0)
    h = h @ p["w2"] + p["b2"]
    h = (h - p["rm2"]) * jax.lax.rsqrt(p["rv2"] + BN_EPS) * p["g2"] + p["beta2"]
    h = jnp.maximum(h, 0.0)
    h = jnp.maximum(h @ p["w3"] + p["b3"], 0.0)
    return h @ p["w4"] + p["b4"]


def _reference_bf16(x, params):
    """Reference that mirrors the kernel's folding / bf16 rounding exactly."""
    fp = _fold_params(params)
    f32 = lambda a: a.astype(jnp.float32)
    h = x.astype(jnp.bfloat16).astype(jnp.float32) @ f32(fp["w1"]) + fp["b1"]
    h = jnp.maximum(h, 0.0)
    h = h.astype(jnp.bfloat16).astype(jnp.float32) @ f32(fp["w2"]) + fp["b2"]
    h = jnp.maximum(h, 0.0)
    h = h.astype(jnp.bfloat16).astype(jnp.float32) @ f32(fp["w3"]) + fp["b3"]
    h = jnp.maximum(h, 0.0)
    return jnp.sum(h * fp["w4"], axis=-1, keepdims=True) + fp["b4"]


if __name__ == "__main__":
    key = jax.random.PRNGKey(0)
    k_x, k_p = jax.random.split(key)

    batch = 8
    input_dim = 32  # extracted EEG feature dimension

    x = jax.random.normal(k_x, (batch, input_dim), jnp.float32)
    params = init_params(input_dim, k_p)

    logits, const_one = eeg_baseline_mlp_forward(x, params)
    logits = jax.block_until_ready(logits)

    ref_exact = _reference_bf16(x, params)   # same dtype handling as kernel
    ref_f32 = _reference_f32(x, params)      # full-precision eval semantics

    assert logits.shape == (batch, 1)
    assert const_one == 1
    assert jnp.allclose(logits, ref_exact, atol=1e-3, rtol=1e-3)
    assert jnp.allclose(logits, ref_f32, atol=5e-2, rtol=5e-2)

    print("KERNEL_OK")
</pallas_src>

<mosaic_0001>
module attributes {stable_mosaic.version = 11 : i64} {
  func.func @_mlp_kernel(%arg0: i32, %arg1: memref<16x32xbf16, #tpu.memory_space<vmem>>, %arg2: memref<32x256xbf16, #tpu.memory_space<vmem>>, %arg3: memref<1x256xf32, #tpu.memory_space<vmem>>, %arg4: memref<256x128xbf16, #tpu.memory_space<vmem>>, %arg5: memref<1x128xf32, #tpu.memory_space<vmem>>, %arg6: memref<128x128xbf16, #tpu.memory_space<vmem>>, %arg7: memref<1x128xf32, #tpu.memory_space<vmem>>, %arg8: memref<1x128xf32, #tpu.memory_space<vmem>>, %arg9: memref<1x1xf32, #tpu.memory_space<vmem>>, %arg10: memref<16x1xf32, #tpu.memory_space<vmem>>) attributes {dimension_semantics = [#tpu.dimension_semantics<parallel>], iteration_bounds = array<i64: 1>, scalar_prefetch = 0 : i64, scratch_operands = 0 : i64, tpu.core_type = #tpu.core_type<tc>, window_params = [{transform_indices = @transform_0, window_bounds = array<i64: 16, 32>}, {pipeline_mode = #tpu.pipeline_mode<synchronous>, transform_indices = @transform_1, window_bounds = array<i64: 32, 256>}, {pipeline_mode = #tpu.pipeline_mode<synchronous>, transform_indices = @transform_2, window_bounds = array<i64: 1, 256>}, {pipeline_mode = #tpu.pipeline_mode<synchronous>, transform_indices = @transform_3, window_bounds = array<i64: 256, 128>}, {pipeline_mode = #tpu.pipeline_mode<synchronous>, transform_indices = @transform_4, window_bounds = array<i64: 1, 128>}, {pipeline_mode = #tpu.pipeline_mode<synchronous>, transform_indices = @transform_5, window_bounds = array<i64: 128, 128>}, {pipeline_mode = #tpu.pipeline_mode<synchronous>, transform_indices = @transform_6, window_bounds = array<i64: 1, 128>}, {pipeline_mode = #tpu.pipeline_mode<synchronous>, transform_indices = @transform_7, window_bounds = array<i64: 1, 128>}, {pipeline_mode = #tpu.pipeline_mode<synchronous>, transform_indices = @transform_8, window_bounds = array<i64: 1, 1>}, {transform_indices = @transform_9, window_bounds = array<i64: 16, 1>}]} {
    %c0 = arith.constant 0 : index
    %c0_0 = arith.constant 0 : index
    %0 = vector.load %arg1[%c0, %c0_0] : memref<16x32xbf16, #tpu.memory_space<vmem>>, vector<16x32xbf16>
    %c0_1 = arith.constant 0 : index
    %c0_2 = arith.constant 0 : index
    %1 = vector.load %arg2[%c0_1, %c0_2] : memref<32x256xbf16, #tpu.memory_space<vmem>>, vector<32x256xbf16>
    %cst = arith.constant dense<0.000000e+00> : vector<16x256xf32>
    %2 = tpu.matmul %0, %1, %cst {dimension_numbers = #tpu.dot_dimension_numbers<[1], [0], [0], [1], [0, 0, 1, 1], [], []>} : vector<16x32xbf16>, vector<32x256xbf16>, vector<16x256xf32> -> vector<16x256xf32>
    %c0_3 = arith.constant 0 : index
    %c0_4 = arith.constant 0 : index
    %3 = vector.load %arg3[%c0_3, %c0_4] : memref<1x256xf32, #tpu.memory_space<vmem>>, vector<1x256xf32>
    %4 = vector.broadcast %3 : vector<1x256xf32> to vector<16x256xf32>
    %5 = arith.addf %2, %4 : vector<16x256xf32>
    %cst_5 = arith.constant 0.000000e+00 : f32
    %6 = vector.broadcast %cst_5 : f32 to vector<16x256xf32>
    %7 = arith.maximumf %5, %6 : vector<16x256xf32>
    %8 = arith.truncf %7 : vector<16x256xf32> to vector<16x256xbf16>
    %c0_6 = arith.constant 0 : index
    %c0_7 = arith.constant 0 : index
    %9 = vector.load %arg4[%c0_6, %c0_7] : memref<256x128xbf16, #tpu.memory_space<vmem>>, vector<256x128xbf16>
    %cst_8 = arith.constant dense<0.000000e+00> : vector<16x128xf32>
    %10 = tpu.matmul %8, %9, %cst_8 {dimension_numbers = #tpu.dot_dimension_numbers<[1], [0], [0], [1], [0, 0, 1, 1], [], []>} : vector<16x256xbf16>, vector<256x128xbf16>, vector<16x128xf32> -> vector<16x128xf32>
    %c0_9 = arith.constant 0 : index
    %c0_10 = arith.constant 0 : index
    %11 = vector.load %arg5[%c0_9, %c0_10] : memref<1x128xf32, #tpu.memory_space<vmem>>, vector<1x128xf32>
    %12 = vector.broadcast %11 : vector<1x128xf32> to vector<16x128xf32>
    %13 = arith.addf %10, %12 : vector<16x128xf32>
    %cst_11 = arith.constant 0.000000e+00 : f32
    %14 = vector.broadcast %cst_11 : f32 to vector<16x128xf32>
    %15 = arith.maximumf %13, %14 : vector<16x128xf32>
    %16 = arith.truncf %15 : vector<16x128xf32> to vector<16x128xbf16>
    %c0_12 = arith.constant 0 : index
    %c0_13 = arith.constant 0 : index
    %17 = vector.load %arg6[%c0_12, %c0_13] : memref<128x128xbf16, #tpu.memory_space<vmem>>, vector<128x128xbf16>
    %cst_14 = arith.constant dense<0.000000e+00> : vector<16x128xf32>
    %18 = tpu.matmul %16, %17, %cst_14 {dimension_numbers = #tpu.dot_dimension_numbers<[1], [0], [0], [1], [0, 0, 1, 1], [], []>} : vector<16x128xbf16>, vector<128x128xbf16>, vector<16x128xf32> -> vector<16x128xf32>
    %c0_15 = arith.constant 0 : index
    %c0_16 = arith.constant 0 : index
    %19 = vector.load %arg7[%c0_15, %c0_16] : memref<1x128xf32, #tpu.memory_space<vmem>>, vector<1x128xf32>
    %20 = vector.broadcast %19 : vector<1x128xf32> to vector<16x128xf32>
    %21 = arith.addf %18, %20 : vector<16x128xf32>
    %cst_17 = arith.constant 0.000000e+00 : f32
    %22 = vector.broadcast %cst_17 : f32 to vector<16x128xf32>
    %23 = arith.maximumf %21, %22 : vector<16x128xf32>
    %c0_18 = arith.constant 0 : index
    %c0_19 = arith.constant 0 : index
    %24 = vector.load %arg8[%c0_18, %c0_19] : memref<1x128xf32, #tpu.memory_space<vmem>>, vector<1x128xf32>
    %25 = vector.broadcast %24 : vector<1x128xf32> to vector<16x128xf32>
    %26 = arith.mulf %23, %25 : vector<16x128xf32>
    %cst_20 = arith.constant dense<0.000000e+00> : vector<16xf32>
    %27 = vector.multi_reduction <add>, %26, %cst_20 [1] : vector<16x128xf32> to vector<16xf32>
    %28 = vector.shape_cast %27 : vector<16xf32> to vector<16x1xf32>
    %c0_21 = arith.constant 0 : index
    %c0_22 = arith.constant 0 : index
    %29 = vector.load %arg9[%c0_21, %c0_22] : memref<1x1xf32, #tpu.memory_space<vmem>>, vector<1x1xf32>
    %30 = vector.broadcast %29 : vector<1x1xf32> to vector<16x1xf32>
    %31 = arith.addf %28, %30 : vector<16x1xf32>
    %c0_23 = arith.constant 0 : index
    %c0_24 = arith.constant 0 : index
    %32 = vector.load %arg10[%c0_23, %c0_24] : memref<16x1xf32, #tpu.memory_space<vmem>>, vector<16x1xf32>
    tpu.vector_store %arg10[%c0_23, %c0_24], %31 {strides = array<i32>} : memref<16x1xf32, #tpu.memory_space<vmem>>, vector<16x1xf32>,
    return
  }
  func.func @transform_0(%arg0: i32) -> (i32, i32) {
    %c0_i32 = arith.constant 0 : i32
    %c0_i32_0 = arith.constant 0 : i32
    return %arg0, %c0_i32 : i32, i32
  }
  func.func @transform_1(%arg0: i32) -> (i32, i32) {
    %c0_i32 = arith.constant 0 : i32
    %c0_i32_0 = arith.constant 0 : i32
    %c0_i32_1 = arith.constant 0 : i32
    return %c0_i32, %c0_i32_0 : i32, i32
  }
  func.func @transform_2(%arg0: i32) -> (i32, i32) {
    %c0_i32 = arith.constant 0 : i32
    %c0_i32_0 = arith.constant 0 : i32
    %c0_i32_1 = arith.constant 0 : i32
    return %c0_i32, %c0_i32_0 : i32, i32
  }
  func.func @transform_3(%arg0: i32) -> (i32, i32) {
    %c0_i32 = arith.constant 0 : i32
    %c0_i32_0 = arith.constant 0 : i32
    %c0_i32_1 = arith.constant 0 : i32
    return %c0_i32, %c0_i32_0 : i32, i32
  }
  func.func @transform_4(%arg0: i32) -> (i32, i32) {
    %c0_i32 = arith.constant 0 : i32
    %c0_i32_0 = arith.constant 0 : i32
    %c0_i32_1 = arith.constant 0 : i32
    return %c0_i32, %c0_i32_0 : i32, i32
  }
  func.func @transform_5(%arg0: i32) -> (i32, i32) {
    %c0_i32 = arith.constant 0 : i32
    %c0_i32_0 = arith.constant 0 : i32
    %c0_i32_1 = arith.constant 0 : i32
    return %c0_i32, %c0_i32_0 : i32, i32
  }
  func.func @transform_6(%arg0: i32) -> (i32, i32) {
    %c0_i32 = arith.constant 0 : i32
    %c0_i32_0 = arith.constant 0 : i32
    %c0_i32_1 = arith.constant 0 : i32
    return %c0_i32, %c0_i32_0 : i32, i32
  }
  func.func @transform_7(%arg0: i32) -> (i32, i32) {
    %c0_i32 = arith.constant 0 : i32
    %c0_i32_0 = arith.constant 0 : i32
    %c0_i32_1 = arith.constant 0 : i32
    return %c0_i32, %c0_i32_0 : i32, i32
  }
  func.func @transform_8(%arg0: i32) -> (i32, i32) {
    %c0_i32 = arith.constant 0 : i32
    %c0_i32_0 = arith.constant 0 : i32
    %c0_i32_1 = arith.constant 0 : i32
    return %c0_i32, %c0_i32_0 : i32, i32
  }
  func.func @transform_9(%arg0: i32) -> (i32, i32) {
    %c0_i32 = arith.constant 0 : i32
    %c0_i32_0 = arith.constant 0 : i32
    return %arg0, %c0_i32 : i32, i32
  }
}

</mosaic_0001>

<llo_original>
// kernel: tpu_custom_call.1
$region0: #{tpu_custom_call.1}
  #allocation0 [shape = 'u32[]', space=smem, size = 0x4, offset = 0x4, fixed_abs, tag = 'smem constant byte address 0x4 - core index']
  #allocation1 [shape = 'u32[144,128]{1,0:T(1,128)}', space=vmem, size = 0x12000, scoped, tag = 'internal scratch']
  #allocation2 [shape = 'f32[1,1]{1,0:T(1,128)S(1)}', space=vmem, size = 0x200, scoped, tag = 'scoped memory for tpu_custom_call.1']
  %s0 = inlined_call_operand.hbm [shape: bf16[16,32], index: 0, kind: input, shape index: {}]
  %s1 = inlined_call_operand.hbm [shape: bf16[32,256], index: 1, kind: input, shape index: {}]
  %s2 = inlined_call_operand.vmem [shape: f32[1,256], index: 2, kind: input, shape index: {}]
  %s3 = inlined_call_operand.hbm [shape: bf16[256,128], index: 3, kind: input, shape index: {}]
  %s4 = inlined_call_operand.vmem [shape: f32[1,128], index: 4, kind: input, shape index: {}]
  %s5 = inlined_call_operand.hbm [shape: bf16[128,128], index: 5, kind: input, shape index: {}]
  %s6 = inlined_call_operand.vmem [shape: f32[1,128], index: 6, kind: input, shape index: {}]
  %s7 = inlined_call_operand.vmem [shape: f32[1,128], index: 7, kind: input, shape index: {}]
  %s8 = inlined_call_operand.<no memory space> [shape: f32[1,1], index: 8, kind: input, shape index: {}]
  %s9 = inlined_call_operand.vmem [shape: f32[16,1], index: 9, kind: output, shape index: {}]
  %s10 = sld [smem:[#allocation0]]
  $region62: #{tpu_custom_call.1} parent=0
    _
  %s12 = ssub.s32 1, %s10
  %s13 = scalar_select 0, %s12, %s10
  %v14 = vstv %s8
  %15 = vst [vmem:[#allocation2] sm:$0x1] %v14
  $region1: #{tpu_custom_call.1} parent=0
    #allocation3 [shape = 'u8[4096]{0}', space=vmem, size = 0x1000, scoped, tag = 'input window, operand 0, single buffered']
    #allocation4 [shape = 's32[1]{0}', space=sflag, size = 0x4, scoped, tag = 'scoped memory for tpu_custom_call.1']
    #allocation5 [shape = 'u8[16384]{0}', space=vmem, size = 0x4000, scoped, tag = 'input window, operand 1, single buffered']
    #allocation6 [shape = 's32[1]{0}', space=sflag, size = 0x4, scoped, tag = 'scoped memory for tpu_custom_call.1']
    #allocation7 [shape = 'u8[65536]{0}', space=vmem, size = 0x10000, scoped, tag = 'input window, operand 3, single buffered']
    #allocation8 [shape = 'u8[32768]{0}', space=vmem, size = 0x8000, scoped, tag = 'input window, operand 5, single buffered']
    #allocation9 [shape = 's32[1]{0}', space=sflag, size = 0x4, scoped, tag = 'scoped memory for tpu_custom_call.1']
    %16 = vsyncpa [#allocation4], 0
    %17 = vsyncpa [#allocation6], 0
    %18 = vsyncpa [#allocation9], 0
    // Predicated region
    $region2: #{tpu_custom_call.1} parent=1 // pred_check
      _
    $region3: #{tpu_custom_call.1} parent=1 // pred_check_branch
      %20 = sbr.rel (0) target = $region5
    $region4: #{tpu_custom_call.1} parent=1 // pred_region
      %s22 = ssub.s32 128, 128
      %23 = vsyncadd [#allocation4], %s22
      %s24 = sshll.u32 [#allocation3], 4
      %s25 = int_to_ptr.vmem [resolvable:$true] %s24
      %30 = dma.hbm_to_vmem [thread:$0]  %s0, 128, %s25, [#allocation4], 64, 64, 4
    $region5: #{tpu_custom_call.1} parent=1 // pred_fallthru
      _
    // Predicated region
    $region6: #{tpu_custom_call.1} parent=1 // pred_check
      _
    $region7: #{tpu_custom_call.1} parent=1 // pred_check_branch
      %32 = sbr.rel (0) target = $region9
    $region8: #{tpu_custom_call.1} parent=1 // pred_region
      %s34 = ssub.s32 512, 512
      %35 = vsyncadd [#allocation6], %s34
      %s36 = sshll.u32 [#allocation5], 4
      %s37 = int_to_ptr.vmem [resolvable:$true] %s36
      %42 = dma.hbm_to_vmem [thread:$0]  %s1, 512, %s37, [#allocation6], 128, 128, 8
    $region9: #{tpu_custom_call.1} parent=1 // pred_fallthru
      _
    // Predicated region
    $region10: #{tpu_custom_call.1} parent=1 // pred_check
      _
    $region11: #{tpu_custom_call.1} parent=1 // pred_check_branch
      %44 = sbr.rel (0) target = $region13
    $region12: #{tpu_custom_call.1} parent=1 // pred_region
      _
    $region13: #{tpu_custom_call.1} parent=1 // pred_fallthru
      _
    // Predicated region
    $region14: #{tpu_custom_call.1} parent=1 // pred_check
      _
    $region15: #{tpu_custom_call.1} parent=1 // pred_check_branch
      %46 = sbr.rel (0) target = $region17
    $region16: #{tpu_custom_call.1} parent=1 // pred_region
      %s48 = ssub.s32 2048, 2048
      %49 = vsyncadd [#allocation6], %s48
      %s50 = sshll.u32 [#allocation7], 4
      %s51 = int_to_ptr.vmem [resolvable:$true] %s50
      %56 = dma.hbm_to_vmem [thread:$0]  %s3, 2048, %s51, [#allocation6], 64, 64, 4
    $region17: #{tpu_custom_call.1} parent=1 // pred_fallthru
      _
    // Predicated region
    $region18: #{tpu_custom_call.1} parent=1 // pred_check
      _
    $region19: #{tpu_custom_call.1} parent=1 // pred_check_branch
      %58 = sbr.rel (0) target = $region21
    $region20: #{tpu_custom_call.1} parent=1 // pred_region
      _
    $region21: #{tpu_custom_call.1} parent=1 // pred_fallthru
      _
    // Predicated region
    $region22: #{tpu_custom_call.1} parent=1 // pred_check
      _
    $region23: #{tpu_custom_call.1} parent=1 // pred_check_branch
      %60 = sbr.rel (0) target = $region25
    $region24: #{tpu_custom_call.1} parent=1 // pred_region
      %s62 = ssub.s32 1024, 1024
      %63 = vsyncadd [#allocation9], %s62
      %s64 = sshll.u32 [#allocation8], 4
      %s65 = int_to_ptr.vmem [resolvable:$true] %s64
      %70 = dma.hbm_to_vmem [thread:$0]  %s5, 1024, %s65, [#allocation9], 64, 64, 4
    $region25: #{tpu_custom_call.1} parent=1 // pred_fallthru
      _
    // Predicated region
    $region26: #{tpu_custom_call.1} parent=1 // pred_check
      _
    $region27: #{tpu_custom_call.1} parent=1 // pred_check_branch
      %72 = sbr.rel (0) target = $region29
    $region28: #{tpu_custom_call.1} parent=1 // pred_region
      _
    $region29: #{tpu_custom_call.1} parent=1 // pred_fallthru
      _
    // Predicated region
    $region30: #{tpu_custom_call.1} parent=1 // pred_check
      _
    $region31: #{tpu_custom_call.1} parent=1 // pred_check_branch
      %74 = sbr.rel (0) target = $region33
    $region32: #{tpu_custom_call.1} parent=1 // pred_region
      _
    $region33: #{tpu_custom_call.1} parent=1 // pred_fallthru
      _
    // Predicated region
    $region34: #{tpu_custom_call.1} parent=1 // pred_check
      _
    $region35: #{tpu_custom_call.1} parent=1 // pred_check_branch
      %76 = sbr.rel (0) target = $region37
    $region36: #{tpu_custom_call.1} parent=1 // pred_region
      _
    $region37: #{tpu_custom_call.1} parent=1 // pred_fallthru
      _
    // Predicated region
    $region38: #{tpu_custom_call.1} parent=1 // pred_check
      _
    $region39: #{tpu_custom_call.1} parent=1 // pred_check_branch
      %78 = sbr.rel (0) target = $region41
    $region40: #{tpu_custom_call.1} parent=1 // pred_region
      %79 = dma.done [#allocation4], 128
    $region41: #{tpu_custom_call.1} parent=1 // pred_fallthru
      _
    // Predicated region
    $region42: #{tpu_custom_call.1} parent=1 // pred_check
      _
    $region43: #{tpu_custom_call.1} parent=1 // pred_check_branch
      %81 = sbr.rel (0) target = $region45
    $region44: #{tpu_custom_call.1} parent=1 // pred_region
      %82 = dma.done [#allocation6], 512
    $region45: #{tpu_custom_call.1} parent=1 // pred_fallthru
      _
    // Predicated region
    $region46: #{tpu_custom_call.1} parent=1 // pred_check
      _
    $region47: #{tpu_custom_call.1} parent=1 // pred_check_branch
      %84 = sbr.rel (0) target = $region49
    $region48: #{tpu_custom_call.1} parent=1 // pred_region
      %85 = dma.done [#allocation6], 2048
    $region49: #{tpu_custom_call.1} parent=1 // pred_fallthru
      _
    // Predicated region
    $region50: #{tpu_custom_call.1} parent=1 // pred_check
      _
    $region51: #{tpu_custom_call.1} parent=1 // pred_check_branch
      %87 = sbr.rel (0) target = $region53
    $region52: #{tpu_custom_call.1} parent=1 // pred_region
      %88 = dma.done [#allocation9], 1024
    $region53: #{tpu_custom_call.1} parent=1 // pred_fallthru
      _
    %v90 = vld [vmem:[#allocation3] sm:$0xf]
    %v91 = vld [vmem:[#allocation3 + $0x4] sm:$0xf]
    %v92 = vld [vmem:[#allocation5] sm:$0xff]
    %v93 = vld [vmem:[#allocation5 + $0x8] sm:$0xff]
    %v94 = vld [vmem:[#allocation5 + $0x10] sm:$0xff]
    %v95 = vld [vmem:[#allocation5 + $0x18] sm:$0xff]
    %v96 = vld [vmem:[%s2] sm:$0x3]
    %v98 = vlaneseq
    %v99 = vshrl.u32 %v98, 7
    %v100 = vsub.s32 0, %v99
    %v101 = vrot.slane %v96, %v100
    %v102 = vlaneseq
    %v103 = vshrl.u32 %v102, 7
    %v104 = vsub.s32 1, %v103
    %v105 = vrot.slane %v96, %v104
    %v110 = vunpack.c.l.b16 %v90
    %v111 = vunpack.c.l.b16 %v91
    %v112 = vpack.c.b16 %v111, %v110
    %v117 = vunpack.c.l.b16 %v92
    %v118 = vunpack.c.h.b16 %v92
    %v119 = vunpack.c.l.b16 %v93
    %v120 = vunpack.c.h.b16 %v93
    %v121 = vunpack.c.l.b16 %v94
    %v122 = vunpack.c.h.b16 %v94
    %v123 = vunpack.c.l.b16 %v95
    %v124 = vunpack.c.h.b16 %v95
    %v125 = vpack.c.b16 %v119, %v117
    %v126 = vpack.c.b16 %v120, %v118
    %v127 = vpack.c.b16 %v123, %v121
    %v128 = vpack.c.b16 %v124, %v122
    %vm133 = vcmask 261120
    %v135 = vsel %vm133, %v112, 0
    %137 = vmatprep.subr.bf16.mxu0 %v126
    %138 = vmatpush1.bf16.msra.mxu0 %v125
    %139 = vmatprep.subr.bf16.mxu0 %v128
    %140 = vmatpush1.bf16.msra.mxu0 %v127
    %141 = vmatprep.subr.bf16.mxu0 0
    %142 = vmatpush1.bf16.msra.mxu0 0
    %143 = vmatprep.subr.bf16.mxu0 0
    %144 = vmatpush1.bf16.msra.mxu0 0
    %145 = vmatprep.subr.bf16.mxu0 0
    %146 = vmatpush1.bf16.msra.mxu0 0
    %147 = vmatprep.subr.bf16.mxu0 0
    %148 = vmatpush1.bf16.msra.mxu0 0
    %149 = vmatprep.subr.bf16.mxu0 0
    %150 = vmatpush1.bf16.msra.mxu0 0
    %151 = vmatprep.subr.bf16.mxu0 0
    %152 = vmatpush1.bf16.msra.mxu0 0
    %153 = vmatprep.subr.bf16.mxu0 0
    %154 = vmatpush1.bf16.msra.mxu0 0
    %155 = vmatprep.subr.bf16.mxu0 0
    %156 = vmatpush1.bf16.msra.mxu0 0
    %157 = vmatprep.subr.bf16.mxu0 0
    %158 = vmatpush1.bf16.msra.mxu0 0
    %159 = vmatprep.subr.bf16.mxu0 0
    %160 = vmatpush1.bf16.msra.mxu0 0
    %161 = vmatprep.subr.bf16.mxu0 0
    %162 = vmatpush1.bf16.msra.mxu0 0
    %163 = vmatprep.subr.bf16.mxu0 0
    %164 = vmatpush1.bf16.msra.mxu0 0
    %165 = vmatprep.subr.bf16.mxu0 0
    %166 = vmatpush1.bf16.msra.mxu0 0
    %167 = vmatprep.subr.bf16.mxu0 0
    %168 = vmatpush1.bf16.msra.mxu0 0
    %169 = vmatprep.mubr.bf16.mxu0 0
    %170 = vmatmul.mubr.bf16.gmra.mrb[0].mxu0 %v135
    %v171 = vpop.f32.mrb[0].mxu0
    %v172 = vadd.f32 %v101, %v171
    %v173 = vpop.f32.mrb[0].mxu0
    %v174 = vadd.f32 %v105, %v173
    %v175 = vpop.f32.mrb[0].mxu0
    %v176 = vadd.f32 %v101, %v175
    %v177 = vpop.f32.mrb[0].mxu0
    %v178 = vadd.f32 %v105, %v177
    %179 = vdwg.mxu0
    %v180 = vmax.f32 %v172, 0.0
    %v181 = vmax.f32 %v174, 0.0
    %v182 = vmax.f32 %v176, 0.0
    %v183 = vmax.f32 %v178, 0.0
    %v184 = vpack.c.bf16 %v182, %v180
    %v185 = vpack.c.bf16 %v183, %v181
    %v186 = vld [vmem:[#allocation7] sm:$0xf]
    %v187 = vld [vmem:[#allocation7 + $0x4] sm:$0xf]
    %v188 = vld [vmem:[#allocation7 + $0x8] sm:$0xf]
    %v189 = vld [vmem:[#allocation7 + $0xc] sm:$0xf]
    %v190 = vld [vmem:[#allocation7 + $0x10] sm:$0xf]
    %v191 = vld [vmem:[#allocation7 + $0x14] sm:$0xf]
    %v192 = vld [vmem:[#allocation7 + $0x18] sm:$0xf]
    %v193 = vld [vmem:[#allocation7 + $0x1c] sm:$0xf]
    %v194 = vld [vmem:[#allocation7 + $0x20] sm:$0xf]
    %v195 = vld [vmem:[#allocation7 + $0x24] sm:$0xf]
    %v196 = vld [vmem:[#allocation7 + $0x28] sm:$0xf]
    %v197 = vld [vmem:[#allocation7 + $0x2c] sm:$0xf]
    %v198 = vld [vmem:[#allocation7 + $0x30] sm:$0xf]
    %v199 = vld [vmem:[#allocation7 + $0x34] sm:$0xf]
    %v200 = vld [vmem:[#allocation7 + $0x38] sm:$0xf]
    %v201 = vld [vmem:[#allocation7 + $0x3c] sm:$0xf]
    %v202 = vld [vmem:[#allocation7 + $0x40] sm:$0xf]
    %v203 = vld [vmem:[#allocation7 + $0x44] sm:$0xf]
    %v204 = vld [vmem:[#allocation7 + $0x48] sm:$0xf]
    %v205 = vld [vmem:[#allocation7 + $0x4c] sm:$0xf]
    %v206 = vld [vmem:[#allocation7 + $0x50] sm:$0xf]
    %v207 = vld [vmem:[#allocation7 + $0x54] sm:$0xf]
    %v208 = vld [vmem:[#allocation7 + $0x58] sm:$0xf]
    %v209 = vld [vmem:[#allocation7 + $0x5c] sm:$0xf]
    %v210 = vld [vmem:[#allocation7 + $0x60] sm:$0xf]
    %v211 = vld [vmem:[#allocation7 + $0x64] sm:$0xf]
    %v212 = vld [vmem:[#allocation7 + $0x68] sm:$0xf]
    %v213 = vld [vmem:[#allocation7 + $0x6c] sm:$0xf]
    %v214 = vld [vmem:[#allocation7 + $0x70] sm:$0xf]
    %v215 = vld [vmem:[#allocation7 + $0x74] sm:$0xf]
    %v216 = vld [vmem:[#allocation7 + $0x78] sm:$0xf]
    %v217 = vld [vmem:[#allocation7 + $0x7c] sm:$0xf]
    %v218 = vld [vmem:[%s4] sm:$0x1]
    %v220 = vlaneseq
    %v221 = vshrl.u32 %v220, 7
    %v222 = vsub.s32 0, %v221
    %v223 = vrot.slane %v218, %v222
    %v257 = vunpack.c.l.b16 %v186
    %v258 = vunpack.c.l.b16 %v187
    %v259 = vunpack.c.l.b16 %v188
    %v260 = vunpack.c.l.b16 %v189
    %v261 = vunpack.c.l.b16 %v190
    %v262 = vunpack.c.l.b16 %v191
    %v263 = vunpack.c.l.b16 %v192
    %v264 = vunpack.c.l.b16 %v193
    %v265 = vunpack.c.l.b16 %v194
    %v266 = vunpack.c.l.b16 %v195
    %v267 = vunpack.c.l.b16 %v196
    %v268 = vunpack.c.l.b16 %v197
    %v269 = vunpack.c.l.b16 %v198
    %v270 = vunpack.c.l.b16 %v199
    %v271 = vunpack.c.l.b16 %v200
    %v272 = vunpack.c.l.b16 %v201
    %v273 = vunpack.c.l.b16 %v202
    %v274 = vunpack.c.l.b16 %v203
    %v275 = vunpack.c.l.b16 %v204
    %v276 = vunpack.c.l.b16 %v205
    %v277 = vunpack.c.l.b16 %v206
    %v278 = vunpack.c.l.b16 %v207
    %v279 = vunpack.c.l.b16 %v208
    %v280 = vunpack.c.l.b16 %v209
    %v281 = vunpack.c.l.b16 %v210
    %v282 = vunpack.c.l.b16 %v211
    %v283 = vunpack.c.l.b16 %v212
    %v284 = vunpack.c.l.b16 %v213
    %v285 = vunpack.c.l.b16 %v214
    %v286 = vunpack.c.l.b16 %v215
    %v287 = vunpack.c.l.b16 %v216
    %v288 = vunpack.c.l.b16 %v217
    %v289 = vpack.c.b16 %v258, %v257
    %v290 = vpack.c.b16 %v260, %v259
    %v291 = vpack.c.b16 %v262, %v261
    %v292 = vpack.c.b16 %v264, %v263
    %v293 = vpack.c.b16 %v266, %v265
    %v294 = vpack.c.b16 %v268, %v267
    %v295 = vpack.c.b16 %v270, %v269
    %v296 = vpack.c.b16 %v272, %v271
    %v297 = vpack.c.b16 %v274, %v273
    %v298 = vpack.c.b16 %v276, %v275
    %v299 = vpack.c.b16 %v278, %v277
    %v300 = vpack.c.b16 %v280, %v279
    %v301 = vpack.c.b16 %v282, %v281
    %v302 = vpack.c.b16 %v284, %v283
    %v303 = vpack.c.b16 %v286, %v285
    %v304 = vpack.c.b16 %v288, %v287
    %321 = vmatprep.subr.bf16.mxu0 0
    %322 = vmatpush1.bf16.msra.mxu0 %v289
    %323 = vmatprep.subr.bf16.mxu0 0
    %324 = vmatpush1.bf16.msra.mxu0 %v290
    %325 = vmatprep.subr.bf16.mxu0 0
    %326 = vmatpush1.bf16.msra.mxu0 %v291
    %327 = vmatprep.subr.bf16.mxu0 0
    %328 = vmatpush1.bf16.msra.mxu0 %v292
    %329 = vmatprep.subr.bf16.mxu0 0
    %330 = vmatpush1.bf16.msra.mxu0 %v293
    %331 = vmatprep.subr.bf16.mxu0 0
    %332 = vmatpush1.bf16.msra.mxu0 %v294
    %333 = vmatprep.subr.bf16.mxu0 0
    %334 = vmatpush1.bf16.msra.mxu0 %v295
    %335 = vmatprep.subr.bf16.mxu0 0
    %336 = vmatpush1.bf16.msra.mxu0 %v296
    %337 = vmatprep.subr.bf16.mxu0 0
    %338 = vmatpush1.bf16.msra.mxu0 %v297
    %339 = vmatprep.subr.bf16.mxu0 0
    %340 = vmatpush1.bf16.msra.mxu0 %v298
    %341 = vmatprep.subr.bf16.mxu0 0
    %342 = vmatpush1.bf16.msra.mxu0 %v299
    %343 = vmatprep.subr.bf16.mxu0 0
    %344 = vmatpush1.bf16.msra.mxu0 %v300
    %345 = vmatprep.subr.bf16.mxu0 0
    %346 = vmatpush1.bf16.msra.mxu0 %v301
    %347 = vmatprep.subr.bf16.mxu0 0
    %348 = vmatpush1.bf16.msra.mxu0 %v302
    %349 = vmatprep.subr.bf16.mxu0 0
    %350 = vmatpush1.bf16.msra.mxu0 %v303
    %351 = vmatprep.subr.bf16.mxu0 0
    %352 = vmatpush1.bf16.msra.mxu0 %v304
    %353 = vmatprep.mubr.bf16.mxu0 %v185
    %354 = vmatmul.mubr.bf16.gmra.mrb[0].mxu0 %v184
    %v355 = vpop.f32.mrb[0].mxu0
    %v356 = vadd.f32 %v223, %v355
    %v357 = vpop.f32.mrb[0].mxu0
    %v358 = vpop.f32.mrb[0].mxu0
    %v359 = vadd.f32 %v223, %v358
    %v360 = vpop.f32.mrb[0].mxu0
    %361 = vdwg.mxu0
    %v362 = vmax.f32 %v356, 0.0
    %v363 = vmax.f32 %v359, 0.0
    %v364 = vpack.c.bf16 %v363, %v362
    %v365 = vld [vmem:[#allocation8] sm:$0xf]
    %v366 = vld [vmem:[#allocation8 + $0x4] sm:$0xf]
    %v367 = vld [vmem:[#allocation8 + $0x8] sm:$0xf]
    %v368 = vld [vmem:[#allocation8 + $0xc] sm:$0xf]
    %v369 = vld [vmem:[#allocation8 + $0x10] sm:$0xf]
    %v370 = vld [vmem:[#allocation8 + $0x14] sm:$0xf]
    %v371 = vld [vmem:[#allocation8 + $0x18] sm:$0xf]
    %v372 = vld [vmem:[#allocation8 + $0x1c] sm:$0xf]
    %v373 = vld [vmem:[#allocation8 + $0x20] sm:$0xf]
    %v374 = vld [vmem:[#allocation8 + $0x24] sm:$0xf]
    %v375 = vld [vmem:[#allocation8 + $0x28] sm:$0xf]
    %v376 = vld [vmem:[#allocation8 + $0x2c] sm:$0xf]
    %v377 = vld [vmem:[#allocation8 + $0x30] sm:$0xf]
    %v378 = vld [vmem:[#allocation8 + $0x34] sm:$0xf]
    %v379 = vld [vmem:[#allocation8 + $0x38] sm:$0xf]
    %v380 = vld [vmem:[#allocation8 + $0x3c] sm:$0xf]
    %v381 = vld [vmem:[%s6] sm:$0x1]
    %v383 = vlaneseq
    %v384 = vshrl.u32 %v383, 7
    %v385 = vsub.s32 0, %v384
    %v386 = vrot.slane %v381, %v385
    %v404 = vunpack.c.l.b16 %v365
    %v405 = vunpack.c.l.b16 %v366
    %v406 = vunpack.c.l.b16 %v367
    %v407 = vunpack.c.l.b16 %v368
    %v408 = vunpack.c.l.b16 %v369
    %v409 = vunpack.c.l.b16 %v370
    %v410 = vunpack.c.l.b16 %v371
    %v411 = vunpack.c.l.b16 %v372
    %v412 = vunpack.c.l.b16 %v373
    %v413 = vunpack.c.l.b16 %v374
    %v414 = vunpack.c.l.b16 %v375
    %v415 = vunpack.c.l.b16 %v376
    %v416 = vunpack.c.l.b16 %v377
    %v417 = vunpack.c.l.b16 %v378
    %v418 = vunpack.c.l.b16 %v379
    %v419 = vunpack.c.l.b16 %v380
    %v420 = vpack.c.b16 %v405, %v404
    %v421 = vpack.c.b16 %v407, %v406
    %v422 = vpack.c.b16 %v409, %v408
    %v423 = vpack.c.b16 %v411, %v410
    %v424 = vpack.c.b16 %v413, %v412
    %v425 = vpack.c.b16 %v415, %v414
    %v426 = vpack.c.b16 %v417, %v416
    %v427 = vpack.c.b16 %v419, %v418
    %436 = vmatprep.subr.bf16.mxu0 0
    %437 = vmatpush1.bf16.msra.mxu0 %v420
    %438 = vmatprep.subr.bf16.mxu0 0
    %439 = vmatpush1.bf16.msra.mxu0 %v421
    %440 = vmatprep.subr.bf16.mxu0 0
    %441 = vmatpush1.bf16.msra.mxu0 %v422
    %442 = vmatprep.subr.bf16.mxu0 0
    %443 = vmatpush1.bf16.msra.mxu0 %v423
    %444 = vmatprep.subr.bf16.mxu0 0
    %445 = vmatpush1.bf16.msra.mxu0 %v424
    %446 = vmatprep.subr.bf16.mxu0 0
    %447 = vmatpush1.bf16.msra.mxu0 %v425
    %448 = vmatprep.subr.bf16.mxu0 0
    %449 = vmatpush1.bf16.msra.mxu0 %v426
    %450 = vmatprep.subr.bf16.mxu0 0
    %451 = vmatpush1.bf16.msra.mxu0 %v427
    %452 = vmatprep.subr.bf16.mxu0 0
    %453 = vmatpush1.bf16.msra.mxu0 0
    %454 = vmatprep.subr.bf16.mxu0 0
    %455 = vmatpush1.bf16.msra.mxu0 0
    %456 = vmatprep.subr.bf16.mxu0 0
    %457 = vmatpush1.bf16.msra.mxu0 0
    %458 = vmatprep.subr.bf16.mxu0 0
    %459 = vmatpush1.bf16.msra.mxu0 0
    %460 = vmatprep.subr.bf16.mxu0 0
    %461 = vmatpush1.bf16.msra.mxu0 0
    %462 = vmatprep.subr.bf16.mxu0 0
    %463 = vmatpush1.bf16.msra.mxu0 0
    %464 = vmatprep.subr.bf16.mxu0 0
    %465 = vmatpush1.bf16.msra.mxu0 0
    %466 = vmatprep.subr.bf16.mxu0 0
    %467 = vmatpush1.bf16.msra.mxu0 0
    %468 = vmatprep.mubr.bf16.mxu0 0
    %469 = vmatmul.mubr.bf16.gmra.mrb[0].mxu0 %v364
    %v470 = vpop.f32.mrb[0].mxu0
    %v471 = vadd.f32 %v386, %v470
    %v472 = vpop.f32.mrb[0].mxu0
    %v473 = vpop.f32.mrb[0].mxu0
    %v474 = vadd.f32 %v386, %v473
    %v475 = vpop.f32.mrb[0].mxu0
    %476 = vdwg.mxu0
    %v477 = vmax.f32 %v471, 0.0
    %v478 = vmax.f32 %v474, 0.0
    %v479 = vld [vmem:[%s7] sm:$0x1]
    %v481 = vlaneseq
    %v482 = vshrl.u32 %v481, 7
    %v483 = vsub.s32 0, %v482
    %v484 = vrot.slane %v479, %v483
    %v486 = vmul.f32 %v477, %v484
    %v487 = vmul.f32 %v478, %v484
    %488 = vadd.xlane.f32.xlu0 %v486
    %v489 = vpop.xlane.xlu0 %488
    %490 = vadd.xlane.f32.xlu0 %v487
    %v491 = vpop.xlane.xlu0 %490
    %v492 = vld [vmem:[#allocation2] sm:$0x1]
    %v494 = vlaneseq
    %v495 = vshrl.u32 %v494, 7
    %v496 = vsub.s32 0, %v495
    %v497 = vrot.slane %v492, %v496
    %v499 = vadd.f32 %v489, %v497
    %v500 = vadd.f32 %v491, %v497
    %vm501 = vcmask 7168
    %502 = vst.msk [vmem:[%s9] sm:$0xff] %vm501, %v499
    %503 = vst.msk [vmem:[%s9 + $0x8] sm:$0xff] %vm501, %v500
    // Predicated region
    $region54: #{tpu_custom_call.1} parent=1 // pred_check
      _
    $region55: #{tpu_custom_call.1} parent=1 // pred_check_branch
      %505 = sbr.rel (0) target = $region57
    $region56: #{tpu_custom_call.1} parent=1 // pred_region
      _
    $region57: #{tpu_custom_call.1} parent=1 // pred_fallthru
      _
    // Predicated region
    $region58: #{tpu_custom_call.1} parent=1 // pred_check
      _
    $region59: #{tpu_custom_call.1} parent=1 // pred_check_branch
      %507 = sbr.rel (0) target = $region61
    $region60: #{tpu_custom_call.1} parent=1 // pred_region
      _
    $region61: #{tpu_custom_call.1} parent=1 // pred_fallthru
      _
    %508 = vsyncpa [#allocation4], 1
    %509 = vsyncpa [#allocation6], 1
    %510 = vsyncpa [#allocation9], 1

</llo_original>
